<compile_context>
chip_gen: v5e
topology: v5e:2x2
jax: 0.10.0
libtpu: 0.0.40
codegen_flags: <defaults>
</compile_context>

<pallas_src>
import jax
import jax.numpy as jnp
from jax.experimental import pallas as pl
from jax.experimental.pallas import tpu as pltpu

LANE = 128
SUBLANE = 8
MAX_BLOCK_ROWS = 8192            # 8192 * 128 * 4 B = 4 MiB per f32 input block
CHUNK_ROWS = 1024                # in-kernel accumulation chunk -> ~0.5 MiB temporaries
VMEM_LIMIT_BYTES = 48 * 1024 * 1024  # 24 MiB of double-buffers + temps, OK on v5e/v6e/v7x


def _cdiv(a, b):
    return -(-a // b)


def _round_up(x, m):
    return _cdiv(x, m) * m


def _make_kernel(tb, rows_valid, needs_mask):
    """Fused per-block partial sum-of-squares kernel.

    Each grid step collapses its (tb, 128) blocks of u, y, f to two (8, 128)
    partials via cheap VPU adds, processing CHUNK_ROWS rows at a time so the
    squared temporaries never exceed ~0.5 MiB of VMEM. When the last grid
    block is ragged (rows % tb != 0), garbage rows are masked out before
    accumulation; the mask is skipped entirely (statically) when aligned.
    """
    chunk = min(tb, CHUNK_ROWS)
    starts = list(range(0, tb, chunk))

    def kernel(u_ref, y_ref, f_ref, uy_out_ref, f_out_ref):
        base = pl.program_id(0) * tb
        acc_uy = jnp.zeros((SUBLANE, LANE), jnp.float32)
        acc_f = jnp.zeros((SUBLANE, LANE), jnp.float32)
        for start in starts:
            size = min(chunk, tb - start)          # static; always a multiple of 8
            u = u_ref[start:start + size, :].astype(jnp.float32)
            y = y_ref[start:start + size, :].astype(jnp.float32)
            f = f_ref[start:start + size, :].astype(jnp.float32)
            d = u - y
            duy = d * d
            df = f * f
            if needs_mask:                         # static decision
                row_ids = base + start + jax.lax.broadcasted_iota(
                    jnp.int32, (size, LANE), 0)
                valid = row_ids < rows_valid
                duy = jnp.where(valid, duy, 0.0)
                df = jnp.where(valid, df, 0.0)
            acc_uy = acc_uy + jnp.sum(duy.reshape(-1, SUBLANE, LANE), axis=0)
            acc_f = acc_f + jnp.sum(df.reshape(-1, SUBLANE, LANE), axis=0)
        uy_out_ref[...] = acc_uy[None]
        f_out_ref[...] = acc_f[None]

    return kernel


def _prepare(x, rows):
    """Flatten to (rows, 128). reshape is layout-free; pad only if truly needed."""
    flat = jnp.ravel(x)
    pad = rows * LANE - flat.shape[0]
    if pad:  # static; only when element count is not a multiple of 128 (or streams differ)
        # TODO(synk): for chronically 128-unaligned producers, pad at the producer or keep
        # the array 1-D with element-granular in-kernel masking to avoid this HBM copy.
        flat = jnp.pad(flat, (0, pad))
    return flat.reshape(rows, LANE)


def _fused_sums(u, y, f):
    """Returns (sum((u-y)^2), u.size, sum(f^2), f.size) via one fused Pallas call."""
    n_u = u.size
    n_f = f.size
    rows = max(_cdiv(n_u, LANE), _cdiv(n_f, LANE))

    # Biggest block up to MAX_BLOCK_ROWS, but aim for >= 2 grid blocks so the
    # "parallel" grid axis can be split across both v7x TensorCores.
    tb = max(SUBLANE, min(MAX_BLOCK_ROWS, _round_up(_cdiv(rows, 2), SUBLANE)))
    num_blocks = _cdiv(rows, tb)
    needs_mask = (rows % tb) != 0   # ragged last block -> mask in kernel (no round-up pad)

    u2 = _prepare(u, rows)
    y2 = _prepare(y, rows)
    f2 = _prepare(f, rows)

    kernel = _make_kernel(tb, rows, needs_mask)

    uy_part, f_part = pl.pallas_call(
        kernel,
        out_shape=(
            jax.ShapeDtypeStruct((num_blocks, SUBLANE, LANE), jnp.float32),
            jax.ShapeDtypeStruct((num_blocks, SUBLANE, LANE), jnp.float32),
        ),
        grid=(num_blocks,),
        in_specs=[
            pl.BlockSpec((tb, LANE), lambda i: (i, 0)),
            pl.BlockSpec((tb, LANE), lambda i: (i, 0)),
            pl.BlockSpec((tb, LANE), lambda i: (i, 0)),
        ],
        out_specs=(
            pl.BlockSpec((1, SUBLANE, LANE), lambda i: (i, 0, 0)),
            pl.BlockSpec((1, SUBLANE, LANE), lambda i: (i, 0, 0)),
        ),
        compiler_params=pltpu.CompilerParams(
            # TODO(synk): verify on a v7x trace that PARALLEL engages the 2-TC split.
            dimension_semantics=(pltpu.PARALLEL,),
            vmem_limit_bytes=VMEM_LIMIT_BYTES,
        ),
    )(u2, y2, f2)

    return jnp.sum(uy_part), n_u, jnp.sum(f_part), n_f


# ---------------------------------------------------------------------------
# Loss with custom VJP (forward = Pallas, backward = closed-form pure XLA).
# ---------------------------------------------------------------------------
from functools import partial


@partial(jax.custom_vjp, nondiff_argnums=(3,))
def _physics_loss(u, f, y, loss_lambda):
    return _forward(u, f, y, loss_lambda)


def _forward(u, f, y, loss_lambda):
    ssq_uy, n_u, ssq_f, n_f = _fused_sums(u, y, f)
    data_loss = jnp.sqrt(ssq_uy / jnp.float32(n_u))
    physics_loss = jnp.sqrt(ssq_f / jnp.float32(n_f)) * jnp.float32(loss_lambda)
    loss = data_loss + physics_loss
    return loss, data_loss, physics_loss


def _physics_loss_fwd(u, f, y, loss_lambda):
    out = _forward(u, f, y, loss_lambda)
    _, data_loss, physics_loss = out
    return out, (u, f, y, data_loss, physics_loss)


def _physics_loss_bwd(loss_lambda, res, cotangents):
    u, f, y, data_loss, physics_loss = res
    g_loss, g_data, g_phys = cotangents
    lam = jnp.float32(loss_lambda)
    n_u = jnp.float32(u.size)
    n_f = jnp.float32(f.size)
    rmse_uy = data_loss
    rmse_f = physics_loss / lam
    inv_uy = jnp.where(rmse_uy > 0, 1.0 / (n_u * rmse_uy), 0.0)
    inv_f = jnp.where(rmse_f > 0, 1.0 / (n_f * rmse_f), 0.0)
    c_data = (g_loss + g_data) * inv_uy
    c_phys = (g_loss + g_phys) * lam * inv_f
    du_f32 = c_data * (u.astype(jnp.float32) - y.astype(jnp.float32))
    du = du_f32.astype(u.dtype)
    dy = (-du_f32).astype(y.dtype)
    df = (c_phys * f.astype(jnp.float32)).astype(f.dtype)
    return du, df, dy


_physics_loss.defvjp(_physics_loss_fwd, _physics_loss_bwd)


def physics_based_loss(u, f, y, loss_lambda=100.0):
    """loss = sqrt(mse(u, y)) + sqrt(mse(f, 0)) * loss_lambda  -> (loss, data_loss, physics_loss)"""
    return _physics_loss(u, f, y, float(loss_lambda))


if __name__ == "__main__":
    key = jax.random.PRNGKey(0)
    ku, kf, ky = jax.random.split(key, 3)

    # Small NCHW-like PINN shapes: prediction u, PDE residual f, target y.
    u = jax.random.normal(ku, (2, 4, 16, 16), dtype=jnp.float32)
    f = jax.random.normal(kf, (2, 4, 16, 16), dtype=jnp.float32) * 0.01
    y = jax.random.normal(ky, (2, 4, 16, 16), dtype=jnp.float32)

    loss, data_loss, physics_loss = jax.block_until_ready(
        jax.jit(physics_based_loss)(u, f, y))

    ref_data = jnp.sqrt(jnp.mean((u - y) ** 2))
    ref_phys = jnp.sqrt(jnp.mean(f ** 2)) * 100.0
    assert jnp.allclose(data_loss, ref_data, rtol=1e-5, atol=1e-6)
    assert jnp.allclose(physics_loss, ref_phys, rtol=1e-5, atol=1e-6)
    assert jnp.allclose(loss, ref_data + ref_phys, rtol=1e-5, atol=1e-6)

    # Non-128-aligned size: exercises the masked ragged-tail path (+ minimal pad).
    shape2 = (2, 3, 17, 16)  # 1632 elements, not a multiple of 128
    u2 = jax.random.normal(ku, shape2, dtype=jnp.float32)
    f2 = jax.random.normal(kf, shape2, dtype=jnp.float32) * 0.01
    y2 = jax.random.normal(ky, shape2, dtype=jnp.float32)
    loss2, d2, p2 = jax.block_until_ready(jax.jit(physics_based_loss)(u2, f2, y2))
    assert jnp.allclose(d2, jnp.sqrt(jnp.mean((u2 - y2) ** 2)), rtol=1e-5, atol=1e-6)
    assert jnp.allclose(p2, jnp.sqrt(jnp.mean(f2 ** 2)) * 100.0, rtol=1e-5, atol=1e-6)
    assert jnp.allclose(loss2, d2 + p2, rtol=1e-5, atol=1e-6)

    # Gradient path through the custom VJP (training use).
    def total(u_, f_, y_):
        return physics_based_loss(u_, f_, y_)[0]

    def total_ref(u_, f_, y_):
        return jnp.sqrt(jnp.mean((u_ - y_) ** 2)) + jnp.sqrt(jnp.mean(f_ ** 2)) * 100.0

    g = jax.block_until_ready(jax.jit(jax.grad(total, argnums=(0, 1, 2)))(u, f, y))
    gr = jax.grad(total_ref, argnums=(0, 1, 2))(u, f, y)
    for a, b in zip(g, gr):
        assert jnp.allclose(a, b, rtol=1e-4, atol=1e-6)

    print("KERNEL_OK")
</pallas_src>

<mosaic_0001>
module attributes {stable_mosaic.version = 11 : i64} {
  func.func @kernel(%arg0: i32, %arg1: memref<8x128xf32, #tpu.memory_space<vmem>>, %arg2: memref<8x128xf32, #tpu.memory_space<vmem>>, %arg3: memref<8x128xf32, #tpu.memory_space<vmem>>, %arg4: memref<1x8x128xf32, #tpu.memory_space<vmem>>, %arg5: memref<1x8x128xf32, #tpu.memory_space<vmem>>) attributes {dimension_semantics = [#tpu.dimension_semantics<parallel>], iteration_bounds = array<i64: 2>, scalar_prefetch = 0 : i64, scratch_operands = 0 : i64, tpu.core_type = #tpu.core_type<tc>, window_params = [{transform_indices = @transform_0, window_bounds = array<i64: 8, 128>}, {transform_indices = @transform_1, window_bounds = array<i64: 8, 128>}, {transform_indices = @transform_2, window_bounds = array<i64: 8, 128>}, {transform_indices = @transform_3, window_bounds = array<i64: 1, 8, 128>}, {transform_indices = @transform_4, window_bounds = array<i64: 1, 8, 128>}]} {
    %cst = arith.constant 0.000000e+00 : f32
    %0 = vector.broadcast %cst : f32 to vector<8x128xf32>
    %cst_0 = arith.constant 0.000000e+00 : f32
    %1 = vector.broadcast %cst_0 : f32 to vector<8x128xf32>
    %c0 = arith.constant 0 : index
    %c0_1 = arith.constant 0 : index
    %2 = vector.load %arg1[%c0, %c0_1] : memref<8x128xf32, #tpu.memory_space<vmem>>, vector<8x128xf32>
    %c0_2 = arith.constant 0 : index
    %c0_3 = arith.constant 0 : index
    %3 = vector.load %arg2[%c0_2, %c0_3] : memref<8x128xf32, #tpu.memory_space<vmem>>, vector<8x128xf32>
    %c0_4 = arith.constant 0 : index
    %c0_5 = arith.constant 0 : index
    %4 = vector.load %arg3[%c0_4, %c0_5] : memref<8x128xf32, #tpu.memory_space<vmem>>, vector<8x128xf32>
    %5 = arith.subf %2, %3 : vector<8x128xf32>
    %6 = arith.mulf %5, %5 : vector<8x128xf32>
    %7 = arith.mulf %4, %4 : vector<8x128xf32>
    %8 = vector.shape_cast %6 : vector<8x128xf32> to vector<1x8x128xf32>
    %cst_6 = arith.constant dense<0.000000e+00> : vector<8x128xf32>
    %9 = vector.multi_reduction <add>, %8, %cst_6 [0] : vector<1x8x128xf32> to vector<8x128xf32>
    %10 = arith.addf %0, %9 : vector<8x128xf32>
    %11 = vector.shape_cast %7 : vector<8x128xf32> to vector<1x8x128xf32>
    %cst_7 = arith.constant dense<0.000000e+00> : vector<8x128xf32>
    %12 = vector.multi_reduction <add>, %11, %cst_7 [0] : vector<1x8x128xf32> to vector<8x128xf32>
    %13 = arith.addf %1, %12 : vector<8x128xf32>
    %14 = vector.shape_cast %10 : vector<8x128xf32> to vector<1x8x128xf32>
    %c0_8 = arith.constant 0 : index
    %c0_9 = arith.constant 0 : index
    %c0_10 = arith.constant 0 : index
    %15 = vector.load %arg4[%c0_8, %c0_9, %c0_10] : memref<1x8x128xf32, #tpu.memory_space<vmem>>, vector<1x8x128xf32>
    tpu.vector_store %arg4[%c0_8, %c0_9, %c0_10], %14 {strides = array<i32>} : memref<1x8x128xf32, #tpu.memory_space<vmem>>, vector<1x8x128xf32>,
    %16 = vector.shape_cast %13 : vector<8x128xf32> to vector<1x8x128xf32>
    %c0_11 = arith.constant 0 : index
    %c0_12 = arith.constant 0 : index
    %c0_13 = arith.constant 0 : index
    %17 = vector.load %arg5[%c0_11, %c0_12, %c0_13] : memref<1x8x128xf32, #tpu.memory_space<vmem>>, vector<1x8x128xf32>
    tpu.vector_store %arg5[%c0_11, %c0_12, %c0_13], %16 {strides = array<i32>} : memref<1x8x128xf32, #tpu.memory_space<vmem>>, vector<1x8x128xf32>,
    return
  }
  func.func @transform_0(%arg0: i32) -> (i32, i32) {
    %c0_i32 = arith.constant 0 : i32
    %c0_i32_0 = arith.constant 0 : i32
    return %arg0, %c0_i32 : i32, i32
  }
  func.func @transform_1(%arg0: i32) -> (i32, i32) {
    %c0_i32 = arith.constant 0 : i32
    %c0_i32_0 = arith.constant 0 : i32
    return %arg0, %c0_i32 : i32, i32
  }
  func.func @transform_2(%arg0: i32) -> (i32, i32) {
    %c0_i32 = arith.constant 0 : i32
    %c0_i32_0 = arith.constant 0 : i32
    return %arg0, %c0_i32 : i32, i32
  }
  func.func @transform_3(%arg0: i32) -> (i32, i32, i32) {
    %c0_i32 = arith.constant 0 : i32
    %c0_i32_0 = arith.constant 0 : i32
    %c0_i32_1 = arith.constant 0 : i32
    return %arg0, %c0_i32, %c0_i32_0 : i32, i32, i32
  }
  func.func @transform_4(%arg0: i32) -> (i32, i32, i32) {
    %c0_i32 = arith.constant 0 : i32
    %c0_i32_0 = arith.constant 0 : i32
    %c0_i32_1 = arith.constant 0 : i32
    return %arg0, %c0_i32, %c0_i32_0 : i32, i32, i32
  }
}

</mosaic_0001>

<llo_original>
// kernel: physics_based_loss.1
$region0: #{physics_based_loss.1}
  #allocation0 [shape = 'u32[]', space=smem, size = 0x4, offset = 0x4, fixed_abs, tag = 'smem constant byte address 0x4 - core index']
  #allocation1 [shape = 'u32[72,128]{1,0:T(1,128)}', space=vmem, size = 0x9000, scoped, tag = 'internal scratch']
  %s0 = inlined_call_operand.vmem [shape: f32[16,128], index: 0, kind: input, shape index: {}]
  %s1 = inlined_call_operand.vmem [shape: f32[16,128], index: 1, kind: input, shape index: {}]
  %s2 = inlined_call_operand.vmem [shape: f32[16,128], index: 2, kind: input, shape index: {}]
  %s3 = inlined_call_operand.vmem [shape: f32[2,8,128], index: 3, kind: output, shape index: {0}]
  %s4 = inlined_call_operand.vmem [shape: f32[2,8,128], index: 4, kind: output, shape index: {1}]
  %5 = xla_tuple %s3, %s4
  %s6 = sld [smem:[#allocation0]]
  $region53: #{physics_based_loss.1} parent=0
    _
  %s8 = ssub.s32 1, %s6
  %s9 = scalar_select 0, %s8, %s6
  loop: start=0, step=1, limit=4
  $region2: #{physics_based_loss.1} parent=0 // loop_pre_header
    _
  $region3: #{physics_based_loss.1} parent=0 // loop_header
    %s11 = sphi 0, %s15
    %p12 = scmp.ge.s32.totalorder %s11, 4
    %s21 = sphi 0, %s23
    %s24 = sphi 0, %s21
    %s25 = sphi 0, %s24
    %s41 = sphi 0, %s25
    %s47 = sphi 0, %s49
    %s50 = sphi 0, %s47
    %s51 = sphi 0, %s50
    %s67 = sphi 0, %s51
    %s73 = sphi 0, %s75
    %s76 = sphi 0, %s73
    %s77 = sphi 0, %s76
    %s93 = sphi 0, %s77
    %s99 = sphi 0, %s101
    %s102 = sphi 0, %s99
    %s103 = sphi 0, %s102
    %s119 = sphi 0, %s103
    %s125 = sphi 0, %s127
    %s128 = sphi 0, %s125
    %s129 = sphi 0, %s128
    %s145 = sphi 0, %s129
  $region4: #{physics_based_loss.1} parent=0 // loop_header_branch
    %14 = sbr.rel (%p12) target = $region8
  $region5: #{physics_based_loss.1} parent=0 // loop_body
    %s16 = ssub.s32 %s11, 1
    %s17 = ssub.s32 %s11, 2
    %s18 = sadd.s32 %s11, 1
    %s19 = ssub.s32 %s11, %s18
    %p20 = scmp.eq.s32.totalorder %s19, 0
    %s22 = sadd.s32 %s21, 1
    %s23 = scalar_select %p20, %s21, %s22
    %p26 = pneg %p20
    %p27 = scmp.eq.s32.totalorder %s11, 1
    %p28 = por %p26, %p27
    %p29 = scmp.ne.s32.totalorder %s21, %s24
    %p30 = scmp.eq.s32.totalorder %s11, 0
    %p31 = por %p29, %p30
    %p32 = scmp.ne.s32.totalorder %s21, %s24
    %p33 = scmp.eq.s32.totalorder %s16, 1
    %p34 = por %p32, %p33
    %p35 = scmp.ne.s32.totalorder %s24, %s25
    %p36 = scmp.eq.s32.totalorder %s16, 0
    %p37 = por %p35, %p36
    %p38 = scmp.ne.s32.totalorder %s24, %s25
    %p39 = scmp.eq.s32.totalorder %s17, 1
    %p40 = por %p38, %p39
    %p42 = scmp.ne.s32.totalorder %s25, %s41
    %p43 = scmp.eq.s32.totalorder %s17, 0
    %p44 = por %p42, %p43
    %s45 = ssub.s32 %s11, %s18
    %p46 = scmp.eq.s32.totalorder %s45, 0
    %s48 = sadd.s32 %s47, 1
    %s49 = scalar_select %p46, %s47, %s48
    %p52 = pneg %p46
    %p53 = scmp.eq.s32.totalorder %s11, 1
    %p54 = por %p52, %p53
    %p55 = scmp.ne.s32.totalorder %s47, %s50
    %p56 = scmp.eq.s32.totalorder %s11, 0
    %p57 = por %p55, %p56
    %p58 = scmp.ne.s32.totalorder %s47, %s50
    %p59 = scmp.eq.s32.totalorder %s16, 1
    %p60 = por %p58, %p59
    %p61 = scmp.ne.s32.totalorder %s50, %s51
    %p62 = scmp.eq.s32.totalorder %s16, 0
    %p63 = por %p61, %p62
    %p64 = scmp.ne.s32.totalorder %s50, %s51
    %p65 = scmp.eq.s32.totalorder %s17, 1
    %p66 = por %p64, %p65
    %p68 = scmp.ne.s32.totalorder %s51, %s67
    %p69 = scmp.eq.s32.totalorder %s17, 0
    %p70 = por %p68, %p69
    %s71 = ssub.s32 %s11, %s18
    %p72 = scmp.eq.s32.totalorder %s71, 0
    %s74 = sadd.s32 %s73, 1
    %s75 = scalar_select %p72, %s73, %s74
    %p78 = pneg %p72
    %p79 = scmp.eq.s32.totalorder %s11, 1
    %p80 = por %p78, %p79
    %p81 = scmp.ne.s32.totalorder %s73, %s76
    %p82 = scmp.eq.s32.totalorder %s11, 0
    %p83 = por %p81, %p82
    %p84 = scmp.ne.s32.totalorder %s73, %s76
    %p85 = scmp.eq.s32.totalorder %s16, 1
    %p86 = por %p84, %p85
    %p87 = scmp.ne.s32.totalorder %s76, %s77
    %p88 = scmp.eq.s32.totalorder %s16, 0
    %p89 = por %p87, %p88
    %p90 = scmp.ne.s32.totalorder %s76, %s77
    %p91 = scmp.eq.s32.totalorder %s17, 1
    %p92 = por %p90, %p91
    %p94 = scmp.ne.s32.totalorder %s77, %s93
    %p95 = scmp.eq.s32.totalorder %s17, 0
    %p96 = por %p94, %p95
    %s97 = ssub.s32 %s11, %s18
    %p98 = scmp.eq.s32.totalorder %s97, 0
    %s100 = sadd.s32 %s99, 1
    %s101 = scalar_select %p98, %s99, %s100
    %p104 = pneg %p98
    %p105 = scmp.eq.s32.totalorder %s11, 1
    %p106 = por %p104, %p105
    %p107 = scmp.ne.s32.totalorder %s99, %s102
    %p108 = scmp.eq.s32.totalorder %s11, 0
    %p109 = por %p107, %p108
    %p110 = scmp.ne.s32.totalorder %s99, %s102
    %p111 = scmp.eq.s32.totalorder %s16, 1
    %p112 = por %p110, %p111
    %p113 = scmp.ne.s32.totalorder %s102, %s103
    %p114 = scmp.eq.s32.totalorder %s16, 0
    %p115 = por %p113, %p114
    %p116 = scmp.ne.s32.totalorder %s102, %s103
    %p117 = scmp.eq.s32.totalorder %s17, 1
    %p118 = por %p116, %p117
    %p120 = scmp.ne.s32.totalorder %s103, %s119
    %p121 = scmp.eq.s32.totalorder %s17, 0
    %p122 = por %p120, %p121
    %s123 = ssub.s32 %s11, %s18
    %p124 = scmp.eq.s32.totalorder %s123, 0
    %s126 = sadd.s32 %s125, 1
    %s127 = scalar_select %p124, %s125, %s126
    %p130 = pneg %p124
    %p131 = scmp.eq.s32.totalorder %s11, 1
    %p132 = por %p130, %p131
    %p133 = scmp.ne.s32.totalorder %s125, %s128
    %p134 = scmp.eq.s32.totalorder %s11, 0
    %p135 = por %p133, %p134
    %p136 = scmp.ne.s32.totalorder %s125, %s128
    %p137 = scmp.eq.s32.totalorder %s16, 1
    %p138 = por %p136, %p137
    %p139 = scmp.ne.s32.totalorder %s128, %s129
    %p140 = scmp.eq.s32.totalorder %s16, 0
    %p141 = por %p139, %p140
    %p142 = scmp.ne.s32.totalorder %s128, %s129
    %p143 = scmp.eq.s32.totalorder %s17, 1
    %p144 = por %p142, %p143
    %p146 = scmp.ne.s32.totalorder %s129, %s145
    %p147 = scmp.eq.s32.totalorder %s17, 0
    %p148 = por %p146, %p147
    %p149 = scmp.le.s32.totalorder 1, %s11
    %p150 = scmp.lt.s32.totalorder %s11, 3
    %p151 = pnand %p149, %p150
    %p152 = pneg %p151
    // Predicated region
    $region9: #{physics_based_loss.1} parent=5 // pred_check
      _
    $region10: #{physics_based_loss.1} parent=5 // pred_check_branch
      %154 = sbr.rel (%p151) target = $region12
    $region11: #{physics_based_loss.1} parent=5 // pred_region
      %s155 = ssub.s32 %s11, 1
    $region12: #{physics_based_loss.1} parent=5 // pred_fallthru
      _
    %p156 = scmp.lt.s32.totalorder %s11, 2
    // Predicated region
    $region13: #{physics_based_loss.1} parent=5 // pred_check
      %p157 = pneg %p156
    $region14: #{physics_based_loss.1} parent=5 // pred_check_branch
      %159 = sbr.rel (%p157) target = $region16
    $region15: #{physics_based_loss.1} parent=5 // pred_region
      // Predicated region
      $region17: #{physics_based_loss.1} parent=15 // pred_check
        %p160 = pneg %p31
      $region18: #{physics_based_loss.1} parent=15 // pred_check_branch
        %162 = sbr.rel (%p160) target = $region20
      $region19: #{physics_based_loss.1} parent=15 // pred_region
        %p163 = scmp.lt.s32.totalorder %s11, 1
        %s164 = scalar_select %p163, %s11, 1
        %s165 = smul.addr %s164, 8
        %s166 = scalar_lea.vmem %s0, %s165
      $region20: #{physics_based_loss.1} parent=15 // pred_fallthru
        _
      // Predicated region
      $region21: #{physics_based_loss.1} parent=15 // pred_check
        %p167 = pneg %p57
      $region22: #{physics_based_loss.1} parent=15 // pred_check_branch
        %169 = sbr.rel (%p167) target = $region24
      $region23: #{physics_based_loss.1} parent=15 // pred_region
        %p170 = scmp.lt.s32.totalorder %s11, 1
        %s171 = scalar_select %p170, %s11, 1
        %s172 = smul.addr %s171, 8
        %s173 = scalar_lea.vmem %s1, %s172
      $region24: #{physics_based_loss.1} parent=15 // pred_fallthru
        _
      // Predicated region
      $region25: #{physics_based_loss.1} parent=15 // pred_check
        %p174 = pneg %p83
      $region26: #{physics_based_loss.1} parent=15 // pred_check_branch
        %176 = sbr.rel (%p174) target = $region28
      $region27: #{physics_based_loss.1} parent=15 // pred_region
        %p177 = scmp.lt.s32.totalorder %s11, 1
        %s178 = scalar_select %p177, %s11, 1
        %s179 = smul.addr %s178, 8
        %s180 = scalar_lea.vmem %s2, %s179
      $region28: #{physics_based_loss.1} parent=15 // pred_fallthru
        _
    $region16: #{physics_based_loss.1} parent=5 // pred_fallthru
      _
    %p181 = scmp.le.s32.totalorder 1, %s11
    %p182 = scmp.lt.s32.totalorder %s11, 3
    %p183 = pnand %p181, %p182
    %p184 = pneg %p183
    // Predicated region
    $region29: #{physics_based_loss.1} parent=5 // pred_check
      _
    $region30: #{physics_based_loss.1} parent=5 // pred_check_branch
      %186 = sbr.rel (%p183) target = $region32
    $region31: #{physics_based_loss.1} parent=5 // pred_region
      %s187 = ssub.s32 %s11, 1
      %p188 = scmp.lt.s32.totalorder %s16, 1
      %s189 = scalar_select %p188, %s16, 1
      %s190 = smul.addr %s189, 8
      %s191 = scalar_lea.vmem %s0, %s190
      %p192 = pneg %p37
      %p193 = pneg %p34
      %p194 = scmp.lt.s32.totalorder %s16, 1
      %s195 = scalar_select %p194, %s16, 1
      %s196 = smul.addr %s195, 8
      %s197 = scalar_lea.vmem %s1, %s196
      %p198 = pneg %p63
      %p199 = pneg %p60
      %p200 = scmp.lt.s32.totalorder %s16, 1
      %s201 = scalar_select %p200, %s16, 1
      %s202 = smul.addr %s201, 8
      %s203 = scalar_lea.vmem %s2, %s202
      %p204 = pneg %p89
      %p205 = pneg %p86
      %p206 = pneg %p115
      %p207 = pneg %p112
      %p208 = scmp.lt.s32.totalorder %s16, 1
      %s209 = scalar_select %p208, %s16, 1
      %s210 = smul.addr %s209, 8
      %s211 = scalar_lea.vmem %s3, %s210
      %p212 = pneg %p141
      %p213 = pneg %p138
      %p214 = scmp.lt.s32.totalorder %s16, 1
      %s215 = scalar_select %p214, %s16, 1
      %s216 = smul.addr %s215, 8
      %s217 = scalar_lea.vmem %s4, %s216
      %p218 = scmp.lt.s32.totalorder %s16, 1
      %s219 = scalar_select %p218, %s16, 1
      %s220 = smul.addr %s219, 8
      %s221 = scalar_lea.vmem %s0, %s220
      %p222 = scmp.lt.s32.totalorder %s16, 1
      %s223 = scalar_select %p222, %s16, 1
      %s224 = smul.addr %s223, 8
      %s225 = scalar_lea.vmem %s1, %s224
      %p226 = scmp.lt.s32.totalorder %s16, 1
      %s227 = scalar_select %p226, %s16, 1
      %s228 = smul.addr %s227, 8
      %s229 = scalar_lea.vmem %s2, %s228
      %p230 = scmp.lt.s32.totalorder %s16, 1
      %s231 = scalar_select %p230, %s16, 1
      %s232 = smul.addr %s231, 8
      %s233 = scalar_lea.vmem %s3, %s232
      %p234 = scmp.lt.s32.totalorder %s16, 1
      %s235 = scalar_select %p234, %s16, 1
      %s236 = smul.addr %s235, 8
      %s237 = scalar_lea.vmem %s4, %s236
      %v238 = vld [vmem:[%s221] sm:$0xff]
      %v239 = vld [vmem:[%s225] sm:$0xff]
      %v240 = vld [vmem:[%s229] sm:$0xff]
      %v241 = vsub.f32 %v238, %v239
      %v242 = vmul.f32 %v241, %v241
      %v243 = vmul.f32 %v240, %v240
      %v244 = vadd.f32 %v242, 0.0
      %v245 = vadd.f32 %v244, 0.0
      %v246 = vadd.f32 %v243, 0.0
      %v247 = vadd.f32 %v246, 0.0
      %248 = vst [vmem:[%s233] sm:$0xff] %v245
      %249 = vst [vmem:[%s237] sm:$0xff] %v247
      %p250 = scmp.lt.s32.totalorder %s16, 1
      %s251 = scalar_select %p250, %s16, 1
      %s252 = smul.addr %s251, 8
      %s253 = scalar_lea.vmem %s3, %s252
      %p254 = scmp.lt.s32.totalorder %s16, 1
      %s255 = scalar_select %p254, %s16, 1
      %s256 = smul.addr %s255, 8
      %s257 = scalar_lea.vmem %s4, %s256
      // Predicated region
      $region33: #{physics_based_loss.1} parent=31 // pred_check
        %p258 = pneg %p112
      $region34: #{physics_based_loss.1} parent=31 // pred_check_branch
        %260 = sbr.rel (%p258) target = $region36
      $region35: #{physics_based_loss.1} parent=31 // pred_region
        _
      $region36: #{physics_based_loss.1} parent=31 // pred_fallthru
        _
      // Predicated region
      $region37: #{physics_based_loss.1} parent=31 // pred_check
        %p261 = pneg %p138
      $region38: #{physics_based_loss.1} parent=31 // pred_check_branch
        %263 = sbr.rel (%p261) target = $region40
      $region39: #{physics_based_loss.1} parent=31 // pred_region
        _
      $region40: #{physics_based_loss.1} parent=31 // pred_fallthru
        _
    $region32: #{physics_based_loss.1} parent=5 // pred_fallthru
      _
    %p264 = scmp.le.s32.totalorder 2, %s11
    // Predicated region
    $region41: #{physics_based_loss.1} parent=5 // pred_check
      %p265 = pneg %p264
    $region42: #{physics_based_loss.1} parent=5 // pred_check_branch
      %267 = sbr.rel (%p265) target = $region44
    $region43: #{physics_based_loss.1} parent=5 // pred_region
      %s268 = ssub.s32 %s11, 2
      // Predicated region
      $region45: #{physics_based_loss.1} parent=43 // pred_check
        %p269 = pneg %p118
      $region46: #{physics_based_loss.1} parent=43 // pred_check_branch
        %271 = sbr.rel (%p269) target = $region48
      $region47: #{physics_based_loss.1} parent=43 // pred_region
        %p272 = scmp.lt.s32.totalorder %s17, 1
        %s273 = scalar_select %p272, %s17, 1
        %s274 = smul.addr %s273, 8
        %s275 = scalar_lea.vmem %s3, %s274
      $region48: #{physics_based_loss.1} parent=43 // pred_fallthru
        _
      // Predicated region
      $region49: #{physics_based_loss.1} parent=43 // pred_check
        %p276 = pneg %p144
      $region50: #{physics_based_loss.1} parent=43 // pred_check_branch
        %278 = sbr.rel (%p276) target = $region52
      $region51: #{physics_based_loss.1} parent=43 // pred_region
        %p279 = scmp.lt.s32.totalorder %s17, 1
        %s280 = scalar_select %p279, %s17, 1
        %s281 = smul.addr %s280, 8
        %s282 = scalar_lea.vmem %s4, %s281
      $region52: #{physics_based_loss.1} parent=43 // pred_fallthru
        _
    $region44: #{physics_based_loss.1} parent=5 // pred_fallthru
      _
  $region6: #{physics_based_loss.1} parent=0 // loop_footer
    %s15 = sadd.s32 1, %s11
  $region7: #{physics_based_loss.1} parent=0 // loop_footer_branch
    %10 = sbr.rel target = $region3
  $region8: #{physics_based_loss.1} parent=0 // loop_exit
    _

</llo_original>
